<compile_context>
chip_gen: v7x
topology: tpu7x:2x2x1
jax: 0.10.0
libtpu: 0.0.40
codegen_flags: <defaults>
</compile_context>

<pallas_src>
import functools

import jax
import jax.numpy as jnp
from jax.experimental import pallas as pl
from jax.experimental.pallas import tpu as pltpu


_SUBLANE_PACK = {1: 32, 2: 16, 4: 8, 8: 8}       # sublane packing per itemsize
_BLOCK_BUDGET_F32_BYTES = 4 * 1024 * 1024         # per-block f32 working set
_VMEM_LIMIT_BYTES = 40 * 1024 * 1024              # safe on v5e/v6e/v7x
_MIN_PALLAS_C = 32                                 # below this, use plain XLA


def _round_up(x, m):
    return ((x + m - 1) // m) * m


def _focal_loss_kernel(logits_ref, targets_ref, *rest, gamma, n_total,
                       has_alpha):
    """One batch tile -> writes this tile's partial loss sum to out_ref."""
    if has_alpha:
        alpha_ref, out_ref = rest
    else:
        (out_ref,) = rest

    x = logits_ref[...].astype(jnp.float32)       # (TILE_N, C), cast in VMEM
    t = targets_ref[...]                          # (TILE_N, 1) i32
    tn, c = x.shape

    col = jax.lax.broadcasted_iota(jnp.int32, (tn, c), 1)
    is_tgt = col == t                             # bool mask, no float one-hot

    # Numerically stable log-prob of the target class only (log-sum-exp).
    m = jnp.max(x, axis=1, keepdims=True)                            # (TILE_N, 1)
    lse = jnp.log(jnp.sum(jnp.exp(x - m), axis=1, keepdims=True))    # (TILE_N, 1)
    x_t = jnp.sum(jnp.where(is_tgt, x, 0.0), axis=1, keepdims=True)  # (TILE_N, 1)
    log_p = (x_t - m) - lse                                          # <= 0
    probs = jnp.exp(log_p)

    # (1 - probs)^gamma, specialized for small integer gamma (default 2):
    # VPU multiplies instead of jnp.power on the single EUP (busy with exp).
    one_minus = 1.0 - probs
    g = float(gamma)
    if g == float(int(g)) and 0 <= int(g) <= 4:
        w = jnp.ones_like(one_minus)
        for _ in range(int(g)):
            w = w * one_minus
    else:
        w = jnp.power(one_minus, g)

    loss = -(w * log_p)                                              # (TILE_N, 1)

    if has_alpha:
        # Per-row alpha gathered in the wrapper; just a VPU multiply here.
        loss = alpha_ref[...].astype(jnp.float32) * loss

    # Mask the ragged tail of the last tile (select, not multiply, so that
    # NaN/Inf from unspecified OOB input rows never propagates).
    row = pl.program_id(0) * tn + jax.lax.broadcasted_iota(
        jnp.int32, (tn, 1), 0)
    masked = jnp.where(row < n_total, loss, 0.0)

    # One partial sum per tile: a single scalar store instead of TILE_N/8
    # lane-sparse masked stores.
    out_ref[...] = jnp.sum(masked, axis=0, keepdims=True).reshape(1, 1, 1)


def _focal_loss_xla(logits, targets, alpha=None, gamma=2, size_average=True):
    """Plain-XLA path: reference checker and tiny-C fallback."""
    logits = logits.astype(jnp.float32)
    targets = jnp.asarray(targets, jnp.int32)
    p = jax.nn.softmax(logits, axis=1)
    probs = jnp.take_along_axis(p, targets[:, None], axis=1)          # (N, 1)
    if alpha is None:
        alpha_i = jnp.ones_like(probs)
    else:
        alpha_i = jnp.asarray(alpha, jnp.float32).reshape(-1)[targets][:, None]
    bl = -alpha_i * (1.0 - probs) ** gamma * jnp.log(probs)
    return jnp.mean(bl) if size_average else jnp.sum(bl)


def focal_loss(logits, targets, alpha=None, gamma=2, size_average=True,
               tile_n=None, use_pallas=None):
    """logits: (N, C) float, targets: (N,) int. Returns scalar f32 loss."""
    n, c = logits.shape

    if use_pallas is None:
        # With C << 128 only a sliver of each vreg carries data; fused XLA
        # softmax-CE wins there.  The Pallas path pays off for larger C.
        use_pallas = c >= _MIN_PALLAS_C
    if not use_pallas:
        return _focal_loss_xla(logits, targets, alpha=alpha, gamma=gamma,
                               size_average=size_average)

    itemsize = jnp.dtype(logits.dtype).itemsize
    sub = _SUBLANE_PACK.get(itemsize, 8)
    c_pad = _round_up(c, 128)                      # lanes pad to 128 in VMEM

    if tile_n is None:
        # Budget the f32 working set of one block (~4 MiB) against the
        # lane-padded class count; double-buffered native-dtype input plus
        # f32 temporaries stays well under the 40 MiB vmem limit below.
        tile_n = max(sub, _BLOCK_BUDGET_F32_BYTES // (c_pad * 4))
    tile_n = max(sub, (int(tile_n) // sub) * sub)  # dtype sublane packing
    if tile_n >= n:
        tile_n = n                                 # single full-extent block
    num_tiles = pl.cdiv(n, tile_n)

    targets_2d = jnp.asarray(targets, jnp.int32).reshape(n, 1)
    has_alpha = alpha is not None

    kernel = functools.partial(_focal_loss_kernel, gamma=float(gamma),
                               n_total=n, has_alpha=has_alpha)

    # No jnp.pad: Pallas pads OOB rows of the ragged last input block and the
    # in-kernel row mask zeroes their contribution.
    in_specs = [
        pl.BlockSpec((tile_n, c), lambda i: (i, 0)),   # logits tile (native dtype)
        pl.BlockSpec((tile_n, 1), lambda i: (i, 0)),   # targets tile
    ]
    args = [logits, targets_2d]
    if has_alpha:
        alpha_flat = jnp.asarray(alpha, jnp.float32).reshape(-1)
        alpha_rows = jnp.take(alpha_flat, targets_2d[:, 0]).reshape(n, 1)
        in_specs.append(pl.BlockSpec((tile_n, 1), lambda i: (i, 0)))
        args.append(alpha_rows)

    partial = pl.pallas_call(
        kernel,
        out_shape=jax.ShapeDtypeStruct((num_tiles, 1, 1), jnp.float32),
        grid=(num_tiles,),
        in_specs=in_specs,
        out_specs=pl.BlockSpec((1, 1, 1), lambda i: (i, 0, 0)),
        compiler_params=pltpu.CompilerParams(
            dimension_semantics=("parallel",),
            vmem_limit_bytes=_VMEM_LIMIT_BYTES),
    )(*args)

    total = jnp.sum(partial)
    # Mean uses the *global* sample count, not the block-local one.
    return total / n if size_average else total


if __name__ == "__main__":
    key = jax.random.PRNGKey(0)
    k1, k2, k3, k4 = jax.random.split(key, 4)

    # Case 1: default FocalLoss(class_num=4): alpha=None, gamma=2, mean.
    # Force the Pallas path at the module's natural tiny class count and use
    # a small tile so the ragged, un-padded last block path is exercised.
    N1, C1 = 37, 4
    logits1 = jax.random.normal(k1, (N1, C1), dtype=jnp.float32)
    targets1 = jax.random.randint(k2, (N1,), 0, C1, dtype=jnp.int32)
    loss1 = jax.block_until_ready(
        focal_loss(logits1, targets1, tile_n=16, use_pallas=True))
    ref1 = _focal_loss_xla(logits1, targets1)
    assert jnp.allclose(loss1, ref1, rtol=1e-5, atol=1e-5), (loss1, ref1)

    # Case 2: larger class count (auto Pallas path), per-class alpha gathered
    # in the wrapper, ragged multi-tile batch, sum reduction.
    N2, C2 = 300, 256
    logits2 = 3.0 * jax.random.normal(k3, (N2, C2), dtype=jnp.float32)
    targets2 = jax.random.randint(k4, (N2,), 0, C2, dtype=jnp.int32)
    alpha2 = jnp.linspace(0.5, 1.5, C2, dtype=jnp.float32).reshape(C2, 1)
    loss2 = jax.block_until_ready(
        focal_loss(logits2, targets2, alpha=alpha2, gamma=2,
                   size_average=False, tile_n=128))
    ref2 = _focal_loss_xla(logits2, targets2, alpha=alpha2, gamma=2,
                           size_average=False)
    assert jnp.allclose(loss2, ref2, rtol=1e-4, atol=1e-2), (loss2, ref2)

    # Case 3: tiny-C auto dispatch takes the XLA fallback path (smoke test).
    loss3 = jax.block_until_ready(focal_loss(logits1, targets1))
    assert jnp.isfinite(loss3) and jnp.allclose(loss3, ref1, rtol=1e-5,
                                                atol=1e-5), (loss3, ref1)

    print("KERNEL_OK")
</pallas_src>

<mosaic_0001>
module attributes {stable_mosaic.version = 11 : i64} {
  func.func @_focal_loss_kernel(%arg0: i32, %arg1: memref<16x4xf32, #tpu.memory_space<vmem>>, %arg2: memref<16x1xi32, #tpu.memory_space<vmem>>, %arg3: memref<1x1x1xf32, #tpu.memory_space<vmem>>) attributes {dimension_semantics = [#tpu.dimension_semantics<parallel>], iteration_bounds = array<i64: 3>, scalar_prefetch = 0 : i64, scratch_operands = 0 : i64, tpu.core_type = #tpu.core_type<tc>, window_params = [{transform_indices = @transform_0, window_bounds = array<i64: 16, 4>}, {transform_indices = @transform_1, window_bounds = array<i64: 16, 1>}, {transform_indices = @transform_2, window_bounds = array<i64: 1, 1, 1>}]} {
    %c0 = arith.constant 0 : index
    %c0_0 = arith.constant 0 : index
    %0 = vector.load %arg1[%c0, %c0_0] : memref<16x4xf32, #tpu.memory_space<vmem>>, vector<16x4xf32>
    %c0_1 = arith.constant 0 : index
    %c0_2 = arith.constant 0 : index
    %1 = vector.load %arg2[%c0_1, %c0_2] : memref<16x1xi32, #tpu.memory_space<vmem>>, vector<16x1xi32>
    %2 = tpu.iota {dimensions = array<i32: 1>} : vector<16x4xi32>
    %3 = vector.broadcast %1 : vector<16x1xi32> to vector<16x4xi32>
    %4 = arith.cmpi eq, %2, %3 : vector<16x4xi32>
    %cst = arith.constant dense<0xFF800000> : vector<16xf32>
    %5 = vector.multi_reduction <maximumf>, %0, %cst [1] : vector<16x4xf32> to vector<16xf32>
    %6 = vector.shape_cast %5 : vector<16xf32> to vector<16x1xf32>
    %7 = vector.broadcast %6 : vector<16x1xf32> to vector<16x4xf32>
    %8 = arith.subf %0, %7 : vector<16x4xf32>
    %9 = math.exp %8 : vector<16x4xf32>
    %cst_3 = arith.constant dense<0.000000e+00> : vector<16xf32>
    %10 = vector.multi_reduction <add>, %9, %cst_3 [1] : vector<16x4xf32> to vector<16xf32>
    %11 = vector.shape_cast %10 : vector<16xf32> to vector<16x1xf32>
    %12 = math.log %11 : vector<16x1xf32>
    %cst_4 = arith.constant 0.000000e+00 : f32
    %13 = vector.broadcast %cst_4 : f32 to vector<16x4xf32>
    %14 = arith.select %4, %0, %13 : vector<16x4xi1>, vector<16x4xf32>
    %cst_5 = arith.constant dense<0.000000e+00> : vector<16xf32>
    %15 = vector.multi_reduction <add>, %14, %cst_5 [1] : vector<16x4xf32> to vector<16xf32>
    %16 = vector.shape_cast %15 : vector<16xf32> to vector<16x1xf32>
    %17 = arith.subf %16, %6 : vector<16x1xf32>
    %18 = arith.subf %17, %12 : vector<16x1xf32>
    %19 = math.exp %18 : vector<16x1xf32>
    %cst_6 = arith.constant 1.000000e+00 : f32
    %20 = vector.broadcast %cst_6 : f32 to vector<16x1xf32>
    %21 = arith.subf %20, %19 : vector<16x1xf32>
    %cst_7 = arith.constant 1.000000e+00 : f32
    %22 = vector.broadcast %cst_7 : f32 to vector<16x1xf32>
    %23 = arith.mulf %22, %21 : vector<16x1xf32>
    %24 = arith.mulf %23, %21 : vector<16x1xf32>
    %25 = arith.mulf %24, %18 : vector<16x1xf32>
    %cst_8 = arith.constant 0.000000e+00 : f32
    %26 = vector.broadcast %cst_8 : f32 to vector<16x1xf32>
    %27 = arith.subf %26, %25 : vector<16x1xf32>
    %c16_i32 = arith.constant 16 : i32
    %28 = arith.muli %arg0, %c16_i32 : i32
    %29 = tpu.iota {dimensions = array<i32: 0>} : vector<16x1xi32>
    %30 = vector.broadcast %28 : i32 to vector<16x1xi32>
    %31 = arith.addi %30, %29 : vector<16x1xi32>
    %c37_i32 = arith.constant 37 : i32
    %32 = vector.broadcast %c37_i32 : i32 to vector<16x1xi32>
    %33 = arith.cmpi slt, %31, %32 : vector<16x1xi32>
    %cst_9 = arith.constant 0.000000e+00 : f32
    %34 = vector.broadcast %cst_9 : f32 to vector<16x1xf32>
    %35 = arith.select %33, %27, %34 : vector<16x1xi1>, vector<16x1xf32>
    %cst_10 = arith.constant dense<0.000000e+00> : vector<1xf32>
    %36 = vector.multi_reduction <add>, %35, %cst_10 [0] : vector<16x1xf32> to vector<1xf32>
    %37 = vector.shape_cast %36 : vector<1xf32> to vector<1x1xf32>
    %38 = vector.shape_cast %37 : vector<1x1xf32> to vector<1x1x1xf32>
    %c0_11 = arith.constant 0 : index
    %c0_12 = arith.constant 0 : index
    %c0_13 = arith.constant 0 : index
    %39 = vector.load %arg3[%c0_11, %c0_12, %c0_13] : memref<1x1x1xf32, #tpu.memory_space<vmem>>, vector<1x1x1xf32>
    tpu.vector_store %arg3[%c0_11, %c0_12, %c0_13], %38 {strides = array<i32>} : memref<1x1x1xf32, #tpu.memory_space<vmem>>, vector<1x1x1xf32>,
    return
  }
  func.func @transform_0(%arg0: i32) -> (i32, i32) {
    %c0_i32 = arith.constant 0 : i32
    %c0_i32_0 = arith.constant 0 : i32
    return %arg0, %c0_i32 : i32, i32
  }
  func.func @transform_1(%arg0: i32) -> (i32, i32) {
    %c0_i32 = arith.constant 0 : i32
    %c0_i32_0 = arith.constant 0 : i32
    return %arg0, %c0_i32 : i32, i32
  }
  func.func @transform_2(%arg0: i32) -> (i32, i32, i32) {
    %c0_i32 = arith.constant 0 : i32
    %c0_i32_0 = arith.constant 0 : i32
    %c0_i32_1 = arith.constant 0 : i32
    return %arg0, %c0_i32, %c0_i32_0 : i32, i32, i32
  }
}

</mosaic_0001>

<llo_original>
// kernel: tpu_custom_call.1
$region0: #{tpu_custom_call.1}
  #allocation0 [shape = 'u32[]', space=smem, size = 0x4, offset = 0x4, fixed_abs, tag = 'smem constant byte address 0x4 - core index']
  #allocation1 [shape = 'u32[144,128]{1,0:T(1,128)}', space=vmem, size = 0x12000, scoped, tag = 'internal scratch']
  %s0 = inlined_call_operand.vmem [shape: f32[37,4], index: 0, kind: input, shape index: {}]
  %s1 = inlined_call_operand.vmem [shape: s32[37,1], index: 1, kind: input, shape index: {}]
  %s2 = inlined_call_operand.vmem [shape: f32[3,1,1], index: 2, kind: output, shape index: {}]
  %s3 = sld [smem:[#allocation0]]
  $region41: #{tpu_custom_call.1} parent=0
    _
  %s5 = ssub.s32 1, %s3
  %s6 = scalar_select 0, %s5, %s3
  loop: start=0, step=1, limit=5
  $region2: #{tpu_custom_call.1} parent=0 // loop_pre_header
    _
  $region3: #{tpu_custom_call.1} parent=0 // loop_header
    %s8 = sphi 0, %s12
    %p9 = scmp.ge.s32.totalorder %s8, 5
    %s18 = sphi 0, %s20
    %s21 = sphi 0, %s18
    %s22 = sphi 0, %s21
    %s38 = sphi 0, %s22
    %s44 = sphi 0, %s46
    %s47 = sphi 0, %s44
    %s48 = sphi 0, %s47
    %s64 = sphi 0, %s48
    %s70 = sphi 0, %s72
    %s73 = sphi 0, %s70
    %s74 = sphi 0, %s73
    %s90 = sphi 0, %s74
  $region4: #{tpu_custom_call.1} parent=0 // loop_header_branch
    %11 = sbr.rel (%p9) target = $region8
  $region5: #{tpu_custom_call.1} parent=0 // loop_body
    %s13 = ssub.s32 %s8, 1
    %s14 = ssub.s32 %s8, 2
    %s15 = sadd.s32 %s8, 1
    %s16 = ssub.s32 %s8, %s15
    %p17 = scmp.eq.s32.totalorder %s16, 0
    %s19 = sadd.s32 %s18, 1
    %s20 = scalar_select %p17, %s18, %s19
    %p23 = pneg %p17
    %p24 = scmp.eq.s32.totalorder %s8, 2
    %p25 = por %p23, %p24
    %p26 = scmp.ne.s32.totalorder %s18, %s21
    %p27 = scmp.eq.s32.totalorder %s8, 0
    %p28 = por %p26, %p27
    %p29 = scmp.ne.s32.totalorder %s18, %s21
    %p30 = scmp.eq.s32.totalorder %s13, 2
    %p31 = por %p29, %p30
    %p32 = scmp.ne.s32.totalorder %s21, %s22
    %p33 = scmp.eq.s32.totalorder %s13, 0
    %p34 = por %p32, %p33
    %p35 = scmp.ne.s32.totalorder %s21, %s22
    %p36 = scmp.eq.s32.totalorder %s14, 2
    %p37 = por %p35, %p36
    %p39 = scmp.ne.s32.totalorder %s22, %s38
    %p40 = scmp.eq.s32.totalorder %s14, 0
    %p41 = por %p39, %p40
    %s42 = ssub.s32 %s8, %s15
    %p43 = scmp.eq.s32.totalorder %s42, 0
    %s45 = sadd.s32 %s44, 1
    %s46 = scalar_select %p43, %s44, %s45
    %p49 = pneg %p43
    %p50 = scmp.eq.s32.totalorder %s8, 2
    %p51 = por %p49, %p50
    %p52 = scmp.ne.s32.totalorder %s44, %s47
    %p53 = scmp.eq.s32.totalorder %s8, 0
    %p54 = por %p52, %p53
    %p55 = scmp.ne.s32.totalorder %s44, %s47
    %p56 = scmp.eq.s32.totalorder %s13, 2
    %p57 = por %p55, %p56
    %p58 = scmp.ne.s32.totalorder %s47, %s48
    %p59 = scmp.eq.s32.totalorder %s13, 0
    %p60 = por %p58, %p59
    %p61 = scmp.ne.s32.totalorder %s47, %s48
    %p62 = scmp.eq.s32.totalorder %s14, 2
    %p63 = por %p61, %p62
    %p65 = scmp.ne.s32.totalorder %s48, %s64
    %p66 = scmp.eq.s32.totalorder %s14, 0
    %p67 = por %p65, %p66
    %s68 = ssub.s32 %s8, %s15
    %p69 = scmp.eq.s32.totalorder %s68, 0
    %s71 = sadd.s32 %s70, 1
    %s72 = scalar_select %p69, %s70, %s71
    %p75 = pneg %p69
    %p76 = scmp.eq.s32.totalorder %s8, 2
    %p77 = por %p75, %p76
    %p78 = scmp.ne.s32.totalorder %s70, %s73
    %p79 = scmp.eq.s32.totalorder %s8, 0
    %p80 = por %p78, %p79
    %p81 = scmp.ne.s32.totalorder %s70, %s73
    %p82 = scmp.eq.s32.totalorder %s13, 2
    %p83 = por %p81, %p82
    %p84 = scmp.ne.s32.totalorder %s73, %s74
    %p85 = scmp.eq.s32.totalorder %s13, 0
    %p86 = por %p84, %p85
    %p87 = scmp.ne.s32.totalorder %s73, %s74
    %p88 = scmp.eq.s32.totalorder %s14, 2
    %p89 = por %p87, %p88
    %p91 = scmp.ne.s32.totalorder %s74, %s90
    %p92 = scmp.eq.s32.totalorder %s14, 0
    %p93 = por %p91, %p92
    %p94 = scmp.le.s32.totalorder 1, %s8
    %p95 = scmp.lt.s32.totalorder %s8, 4
    %p96 = pnand %p94, %p95
    %p97 = pneg %p96
    // Predicated region
    $region9: #{tpu_custom_call.1} parent=5 // pred_check
      _
    $region10: #{tpu_custom_call.1} parent=5 // pred_check_branch
      %99 = sbr.rel (%p96) target = $region12
    $region11: #{tpu_custom_call.1} parent=5 // pred_region
      %s100 = ssub.s32 %s8, 1
    $region12: #{tpu_custom_call.1} parent=5 // pred_fallthru
      _
    %p101 = scmp.lt.s32.totalorder %s8, 3
    // Predicated region
    $region13: #{tpu_custom_call.1} parent=5 // pred_check
      %p102 = pneg %p101
    $region14: #{tpu_custom_call.1} parent=5 // pred_check_branch
      %104 = sbr.rel (%p102) target = $region16
    $region15: #{tpu_custom_call.1} parent=5 // pred_region
      // Predicated region
      $region17: #{tpu_custom_call.1} parent=15 // pred_check
        %p105 = pneg %p28
      $region18: #{tpu_custom_call.1} parent=15 // pred_check_branch
        %107 = sbr.rel (%p105) target = $region20
      $region19: #{tpu_custom_call.1} parent=15 // pred_region
        %s108 = smul.u32 2, %s8
        %s109 = ssub.s32 5, %s108
        %p110 = scmp.lt.s32.totalorder %s109, 2
        %s111 = scalar_select %p110, %s109, 2
        %s112 = smul.u32 128, %s111
        %p113 = scmp.lt.s32.totalorder %s108, 4
        %s114 = scalar_select %p113, %s108, 4
        %s115 = smul.addr %s114, 8
        %s116 = scalar_lea.vmem %s0, %s115
        %s117 = smul.u32 2, %s8
        %s118 = ssub.s32 5, %s117
        %p119 = scmp.lt.s32.totalorder %s118, 2
        %s120 = scalar_select %p119, %s118, 2
        %s121 = smul.u32 128, %s120
      $region20: #{tpu_custom_call.1} parent=15 // pred_fallthru
        _
      // Predicated region
      $region21: #{tpu_custom_call.1} parent=15 // pred_check
        %p122 = pneg %p54
      $region22: #{tpu_custom_call.1} parent=15 // pred_check_branch
        %124 = sbr.rel (%p122) target = $region24
      $region23: #{tpu_custom_call.1} parent=15 // pred_region
        %s125 = smul.u32 2, %s8
        %s126 = ssub.s32 5, %s125
        %p127 = scmp.lt.s32.totalorder %s126, 2
        %s128 = scalar_select %p127, %s126, 2
        %s129 = smul.u32 128, %s128
        %p130 = scmp.lt.s32.totalorder %s125, 4
        %s131 = scalar_select %p130, %s125, 4
        %s132 = smul.addr %s131, 8
        %s133 = scalar_lea.vmem %s1, %s132
        %s134 = smul.u32 2, %s8
        %s135 = ssub.s32 5, %s134
        %p136 = scmp.lt.s32.totalorder %s135, 2
        %s137 = scalar_select %p136, %s135, 2
        %s138 = smul.u32 128, %s137
      $region24: #{tpu_custom_call.1} parent=15 // pred_fallthru
        _
    $region16: #{tpu_custom_call.1} parent=5 // pred_fallthru
      _
    %p139 = scmp.le.s32.totalorder 1, %s8
    %p140 = scmp.lt.s32.totalorder %s8, 4
    %p141 = pnand %p139, %p140
    %p142 = pneg %p141
    // Predicated region
    $region25: #{tpu_custom_call.1} parent=5 // pred_check
      _
    $region26: #{tpu_custom_call.1} parent=5 // pred_check_branch
      %144 = sbr.rel (%p141) target = $region28
    $region27: #{tpu_custom_call.1} parent=5 // pred_region
      %s145 = ssub.s32 %s8, 1
      %s146 = smul.u32 2, %s13
      %s147 = ssub.s32 5, %s146
      %p148 = scmp.lt.s32.totalorder %s147, 2
      %s149 = scalar_select %p148, %s147, 2
      %s150 = smul.u32 128, %s149
      %p151 = scmp.lt.s32.totalorder %s146, 4
      %s152 = scalar_select %p151, %s146, 4
      %s153 = smul.addr %s152, 8
      %s154 = scalar_lea.vmem %s0, %s153
      %p155 = pneg %p34
      %p156 = pneg %p31
      %s157 = smul.u32 2, %s13
      %s158 = ssub.s32 5, %s157
      %p159 = scmp.lt.s32.totalorder %s158, 2
      %s160 = scalar_select %p159, %s158, 2
      %s161 = smul.u32 128, %s160
      %p162 = scmp.lt.s32.totalorder %s157, 4
      %s163 = scalar_select %p162, %s157, 4
      %s164 = smul.addr %s163, 8
      %s165 = scalar_lea.vmem %s1, %s164
      %p166 = pneg %p60
      %p167 = pneg %p57
      %p168 = pneg %p86
      %p169 = pneg %p83
      %p170 = scmp.lt.s32.totalorder %s13, 2
      %s171 = scalar_select %p170, %s13, 2
      %s172 = scalar_lea.vmem %s2, %s171
      %s173 = smul.u32 2, %s13
      %s174 = ssub.s32 5, %s173
      %p175 = scmp.lt.s32.totalorder %s174, 2
      %s176 = scalar_select %p175, %s174, 2
      %s177 = smul.u32 128, %s176
      %p178 = scmp.lt.s32.totalorder %s173, 4
      %s179 = scalar_select %p178, %s173, 4
      %s180 = smul.addr %s179, 8
      %s181 = scalar_lea.vmem %s0, %s180
      %s182 = smul.u32 2, %s13
      %s183 = ssub.s32 5, %s182
      %p184 = scmp.lt.s32.totalorder %s183, 2
      %s185 = scalar_select %p184, %s183, 2
      %s186 = smul.u32 128, %s185
      %s187 = smul.u32 2, %s13
      %s188 = ssub.s32 5, %s187
      %p189 = scmp.lt.s32.totalorder %s188, 2
      %s190 = scalar_select %p189, %s188, 2
      %s191 = smul.u32 128, %s190
      %p192 = scmp.lt.s32.totalorder %s187, 4
      %s193 = scalar_select %p192, %s187, 4
      %s194 = smul.addr %s193, 8
      %s195 = scalar_lea.vmem %s1, %s194
      %s196 = smul.u32 2, %s13
      %s197 = ssub.s32 5, %s196
      %p198 = scmp.lt.s32.totalorder %s197, 2
      %s199 = scalar_select %p198, %s197, 2
      %s200 = smul.u32 128, %s199
      %p201 = scmp.lt.s32.totalorder %s13, 2
      %s202 = scalar_select %p201, %s13, 2
      %s203 = scalar_lea.vmem %s2, %s202
      %v204 = vld [vmem:[%s181] sm:$0xff]
      %v205 = vld [vmem:[%s181 + $0x8] sm:$0xff]
      %v206 = vld [vmem:[%s195] sm:$0xff]
      %v207 = vld [vmem:[%s195 + $0x8] sm:$0xff]
      %v208 = vlaneseq
      %v209 = vand.u32 %v208, 127
      %210 = vset.pattern.permute.xlu0 0
      %211 = vperm.xlu0 %210, %v206
      %v212 = vpop.permute.xlu0 %211
      %213 = vset.pattern.permute.xlu0 0
      %214 = vperm.xlu0 %213, %v207
      %v215 = vpop.permute.xlu0 %214
      %vm216 = vcmp.eq.s32.totalorder %v209, %v212
      %vm217 = vcmp.eq.s32.totalorder %v209, %v215
      %vm218 = vcmask 31744
      %v219 = vsel %vm218, %v204, -inf
      %220 = vmax.xlane.f32.xlu0 %v219
      %v221 = vpop.xlane.xlu0 %220
      %v222 = vsel %vm218, %v205, -inf
      %223 = vmax.xlane.f32.xlu0 %v222
      %v224 = vpop.xlane.xlu0 %223
      %v225 = vsub.f32 %v204, %v221
      %v226 = vsub.f32 %v205, %v224
      %v227 = vmul.f32 %v225, 1.442695
      %v228 = vpow.pop %v227
      %v229 = vmul.f32 %v226, 1.442695
      %v230 = vpow.pop %v229
      %v231 = vsel %vm218, %v228, 0.0
      %232 = vadd.xlane.f32.xlu0 %v231
      %v233 = vpop.xlane.xlu0 %232
      %v234 = vsel %vm218, %v230, 0.0
      %235 = vadd.xlane.f32.xlu0 %v234
      %v236 = vpop.xlane.xlu0 %235
      %v237 = vlog2.pop %v233
      %v238 = vmul.f32 %v237, 0.6931472
      %v239 = vlog2.pop %v236
      %v240 = vmul.f32 %v239, 0.6931472
      %v241 = vsel %vm216, %v204, 0.0
      %v242 = vsel %vm217, %v205, 0.0
      %v243 = vsel %vm218, %v241, 0.0
      %244 = vadd.xlane.f32.xlu0 %v243
      %v245 = vpop.xlane.xlu0 %244
      %v246 = vsel %vm218, %v242, 0.0
      %247 = vadd.xlane.f32.xlu0 %v246
      %v248 = vpop.xlane.xlu0 %247
      %v249 = vsub.f32 %v245, %v221
      %v250 = vsub.f32 %v248, %v224
      %v251 = vsub.f32 %v249, %v238
      %v252 = vsub.f32 %v250, %v240
      %v253 = vmul.f32 %v251, 1.442695
      %v254 = vpow.pop %v253
      %v255 = vmul.f32 %v252, 1.442695
      %v256 = vpow.pop %v255
      %v257 = vsub.f32 1.0, %v254
      %v258 = vsub.f32 1.0, %v256
      %v259 = vmul.f32 %v257, %v257
      %v260 = vmul.f32 %v258, %v258
      %v261 = vmul.f32 %v259, %v251
      %v262 = vmul.f32 %v260, %v252
      %v263 = vsub.f32 0.0, %v261
      %v264 = vsub.f32 0.0, %v262
      %s265 = smul.u32 %s13, 16
      %v266 = vlaneseq
      %v267 = vshrl.u32 %v266, 7
      %v268 = vadd.s32 %v267, 8
      %v269 = vstv %s265
      %v270 = vadd.s32 %v269, %v267
      %v271 = vadd.s32 %v269, %v268
      %vm272 = vcmp.lt.s32.totalorder %v270, 37
      %vm273 = vcmp.lt.s32.totalorder %v271, 37
      %v274 = vsel %vm272, %v263, 0.0
      %v275 = vsel %vm273, %v264, 0.0
      %v276 = vadd.f32 %v274, %v275
      %v277 = vrot.slane %v276, 4
      %v278 = vadd.f32 %v276, %v277
      %v279 = vrot.slane %v278, 2
      %v280 = vadd.f32 %v278, %v279
      %v281 = vrot.slane %v280, 1
      %v282 = vadd.f32 %v280, %v281
      %vm283 = vcmask 0
      %284 = vst.msk [vmem:[%s203] sm:$0x1] %vm283, %v282
      %p285 = scmp.lt.s32.totalorder %s13, 2
      %s286 = scalar_select %p285, %s13, 2
      %s287 = scalar_lea.vmem %s2, %s286
      // Predicated region
      $region29: #{tpu_custom_call.1} parent=27 // pred_check
        %p288 = pneg %p83
      $region30: #{tpu_custom_call.1} parent=27 // pred_check_branch
        %290 = sbr.rel (%p288) target = $region32
      $region31: #{tpu_custom_call.1} parent=27 // pred_region
        _
      $region32: #{tpu_custom_call.1} parent=27 // pred_fallthru
        _
    $region28: #{tpu_custom_call.1} parent=5 // pred_fallthru
      _
    %p291 = scmp.le.s32.totalorder 2, %s8
    // Predicated region
    $region33: #{tpu_custom_call.1} parent=5 // pred_check
      %p292 = pneg %p291
    $region34: #{tpu_custom_call.1} parent=5 // pred_check_branch
      %294 = sbr.rel (%p292) target = $region36
    $region35: #{tpu_custom_call.1} parent=5 // pred_region
      %s295 = ssub.s32 %s8, 2
      // Predicated region
      $region37: #{tpu_custom_call.1} parent=35 // pred_check
        %p296 = pneg %p89
      $region38: #{tpu_custom_call.1} parent=35 // pred_check_branch
        %298 = sbr.rel (%p296) target = $region40
      $region39: #{tpu_custom_call.1} parent=35 // pred_region
        %p299 = scmp.lt.s32.totalorder %s14, 2
        %s300 = scalar_select %p299, %s14, 2
        %s301 = scalar_lea.vmem %s2, %s300
      $region40: #{tpu_custom_call.1} parent=35 // pred_fallthru
        _
    $region36: #{tpu_custom_call.1} parent=5 // pred_fallthru
      _
  $region6: #{tpu_custom_call.1} parent=0 // loop_footer
    %s12 = sadd.s32 1, %s8
  $region7: #{tpu_custom_call.1} parent=0 // loop_footer_branch
    %7 = sbr.rel target = $region3
  $region8: #{tpu_custom_call.1} parent=0 // loop_exit
    _

</llo_original>
